<compile_context>
chip_gen: v7x
topology: tpu7x:2x2x1
jax: 0.10.0
libtpu: 0.0.40
codegen_flags: <defaults>
</compile_context>

<pallas_src>
import math
from functools import partial

import numpy as np
import jax
import jax.numpy as jnp
from jax.experimental import pallas as pl
from jax.experimental.pallas import tpu as pltpu


# ---------------------------------------------------------------------------
# in-kernel helper: fused-weight GRUCell on all rows
# ---------------------------------------------------------------------------
def _gru_fused(x, h, wih, whh, bih, bhh, H):
    """PyTorch nn.GRUCell, 2 fused matmuls: (N,G)@(G,3H) and (N,H)@(H,3H)."""
    f32 = jnp.float32
    gi = jnp.dot(x, wih, preferred_element_type=f32) + bih        # (N, 3H)
    gh = jnp.dot(h, whh, preferred_element_type=f32) + bhh        # (N, 3H)
    r = jax.nn.sigmoid(gi[:, 0:H] + gh[:, 0:H])
    z = jax.nn.sigmoid(gi[:, H:2 * H] + gh[:, H:2 * H])
    n = jnp.tanh(gi[:, 2 * H:3 * H] + r * gh[:, 2 * H:3 * H])
    return (1.0 - z) * n + z * h


# ---------------------------------------------------------------------------
# kernels (single invocation, fully VMEM-resident at these shapes)
# ---------------------------------------------------------------------------
def _not_last_kernel(co_ref, h_ref, mask_ref, wih_ref, whh_ref, b_ref, tf_ref,
                     out_ref, hnew_ref):
    H = h_ref.shape[1]
    b = b_ref[...]                                                # (2, 3H)
    h_gru = _gru_fused(co_ref[...], h_ref[...], wih_ref[...], whh_ref[...],
                       b[0:1, :], b[1:2, :], H)                   # (N, H)
    m = mask_ref[...] > 0.0                                       # (N, 1)
    hnew_ref[...] = jnp.where(m, h_gru, 0.0)
    neg_inf = jnp.float32(-jnp.inf)
    # TODO(synk): if m123 is empty the masked max yields -inf; torch would raise
    #             on max of an empty tensor, so that degenerate case is undefined.
    out = jnp.max(jnp.where(m, h_gru, neg_inf), axis=0, keepdims=True)  # (1, H)
    out_ref[...] = out + tf_ref[...]


def _last_kernel(co_ref, h_ref, wih_ref, whh_ref, b_ref, tf_ref, out_ref):
    H = h_ref.shape[1]
    b = b_ref[...]
    h_gru = _gru_fused(co_ref[...], h_ref[...], wih_ref[...], whh_ref[...],
                       b[0:1, :], b[1:2, :], H)
    out_ref[...] = h_gru + tf_ref[...]


# ---------------------------------------------------------------------------
# params + host glue (weight packing hoisted out of the per-step forward)
# ---------------------------------------------------------------------------
def init_params(key, graph_size, hidden_size, time_size):
    ks = jax.random.split(key, 6)
    s = 0.1
    return {
        "gru_w_ih": s * jax.random.normal(ks[0], (3 * hidden_size, graph_size), jnp.float32),
        "gru_w_hh": s * jax.random.normal(ks[1], (3 * hidden_size, hidden_size), jnp.float32),
        "gru_b_ih": s * jax.random.normal(ks[2], (3 * hidden_size,), jnp.float32),
        "gru_b_hh": s * jax.random.normal(ks[3], (3 * hidden_size,), jnp.float32),
        "time_w":   s * jax.random.normal(ks[4], (time_size, 1), jnp.float32),
        "time_b":   s * jax.random.normal(ks[5], (time_size,), jnp.float32),
    }


def prepare_params(params):
    """One-time weight packing: fused/transposed GRU weights, stacked biases."""
    H3 = params["gru_w_ih"].shape[0]
    return {
        "wih": jnp.asarray(params["gru_w_ih"]).T,                      # (G, 3H)
        "whh": jnp.asarray(params["gru_w_hh"]).T,                      # (H, 3H)
        "b":   jnp.stack([jnp.asarray(params["gru_b_ih"]),
                          jnp.asarray(params["gru_b_hh"])], axis=0),   # (2, 3H)
        "tw":  jnp.asarray(params["time_w"])[:, 0].reshape(1, -1),     # (1, T)
        "tb":  jnp.asarray(params["time_b"]).reshape(1, -1),           # (1, T)
    }


@partial(jax.jit, static_argnames=("is_last",))
def _forward_jit(prepped, interval, co, divided, h, is_last):
    f32 = jnp.float32
    N = co.shape[0]
    H = prepped["whh"].shape[0]

    # time features: tanh(Linear_{1->T}(1/log(interval + e))), computed in JAX
    tf = jnp.tanh((1.0 / jnp.log(interval + math.e)) * prepped["tw"]
                  + prepped["tb"])                                     # (1, T)

    vmem = pl.BlockSpec(memory_space=pltpu.MemorySpace.VMEM)
    # TODO(synk): at realistic code_num scale, add a row-tiled grid with
    #             dimension_semantics=("parallel",) to use both v7x TensorCores.
    if is_last:
        out = pl.pallas_call(
            _last_kernel,
            out_shape=jax.ShapeDtypeStruct((N, H), f32),
            in_specs=[vmem] * 6,
            out_specs=vmem,
        )(co, h, prepped["wih"], prepped["whh"], prepped["b"], tf)
        return out, None

    m123 = jnp.any(divided > 0, axis=1).astype(f32).reshape(N, 1)      # (N, 1)
    out, h_new = pl.pallas_call(
        _not_last_kernel,
        out_shape=(jax.ShapeDtypeStruct((1, H), f32),
                   jax.ShapeDtypeStruct((N, H), f32)),
        in_specs=[vmem] * 7,
        out_specs=(vmem, vmem),
    )(co, h, m123, prepped["wih"], prepped["whh"], prepped["b"], tf)
    return out[0], h_new


def transition_forward(prepped, interval, t, co_embeddings, divided,
                       no_embeddings, unrelated_embeddings, is_last,
                       hidden_state=None):
    # `t`, `no_embeddings`, `unrelated_embeddings` are unused by the Ablation forward.
    del t, no_embeddings, unrelated_embeddings
    N = co_embeddings.shape[0]
    H = prepped["whh"].shape[0]
    h = hidden_state if hidden_state is not None else jnp.zeros((N, H), jnp.float32)
    return _forward_jit(prepped, jnp.asarray(interval, jnp.float32),
                        co_embeddings, divided, h, is_last)


# ---------------------------------------------------------------------------
# numpy reference (mirrors the PyTorch Ablation module, index-based)
# ---------------------------------------------------------------------------
def _np_sigmoid(x):
    return 1.0 / (1.0 + np.exp(-x))


def np_reference(params, interval, co, divided, is_last, hidden):
    p = {k: np.asarray(v) for k, v in params.items()}
    H = p["gru_w_hh"].shape[1]

    def gru(x, h_):
        if h_ is None:
            h_ = np.zeros((x.shape[0], H), np.float32)
        gi = x @ p["gru_w_ih"].T + p["gru_b_ih"]
        gh = h_ @ p["gru_w_hh"].T + p["gru_b_hh"]
        r = _np_sigmoid(gi[:, :H] + gh[:, :H])
        z = _np_sigmoid(gi[:, H:2 * H] + gh[:, H:2 * H])
        n = np.tanh(gi[:, 2 * H:] + r * gh[:, 2 * H:])
        return (1 - z) * n + z * h_

    tf = np.tanh((1.0 / np.log(interval + math.e)) * p["time_w"][:, 0] + p["time_b"])

    if is_last:
        return gru(co, hidden) + tf, None

    m123 = np.where((divided > 0).any(axis=1))[0]
    h_new = np.zeros((co.shape[0], H), np.float32)
    hm = gru(co[m123], hidden[m123] if hidden is not None else None)
    h_new[m123] = hm
    output = hm.max(axis=0)
    return output + tf, h_new


# ---------------------------------------------------------------------------
# main
# ---------------------------------------------------------------------------
if __name__ == "__main__":
    code_num, graph_size = 16, 32
    hidden_size = time_size = 32

    key = jax.random.PRNGKey(0)
    kp, k1, k2, k3, k4 = jax.random.split(key, 5)
    params = init_params(kp, graph_size, hidden_size, time_size)
    prepped = prepare_params(params)

    co = jax.random.normal(k1, (code_num, graph_size), jnp.float32)
    no = jax.random.normal(k2, (code_num, graph_size), jnp.float32)      # unused (ablation)
    un = jax.random.normal(k3, (code_num, graph_size), jnp.float32)      # unused (ablation)
    hidden = jax.random.normal(k4, (code_num, hidden_size), jnp.float32)

    # m1 / m2 / m3 membership; row 11 is in none of them (tests the zero rows of h_new)
    divided_np = np.zeros((code_num, 3), np.float32)
    divided_np[0:6, 0] = 1.0
    divided_np[6:11, 1] = 1.0
    divided_np[12:16, 2] = 1.0
    divided = jnp.asarray(divided_np)

    interval, t = 3.0, 2

    # ---- not-last branch ----
    out, h_new = transition_forward(prepped, interval, t, co, divided, no, un,
                                    is_last=False, hidden_state=hidden)
    out = jax.block_until_ready(out)
    h_new = jax.block_until_ready(h_new)

    out_ref, h_new_ref = np_reference(params, interval, np.asarray(co),
                                      divided_np, False, np.asarray(hidden))
    np.testing.assert_allclose(np.asarray(out), out_ref, rtol=2e-3, atol=2e-3)
    np.testing.assert_allclose(np.asarray(h_new), h_new_ref, rtol=2e-3, atol=2e-3)

    # ---- not-last branch, hidden_state=None ----
    out0, h_new0 = transition_forward(prepped, interval, t, co, divided, no, un,
                                      is_last=False, hidden_state=None)
    out0 = jax.block_until_ready(out0)
    out0_ref, h_new0_ref = np_reference(params, interval, np.asarray(co),
                                        divided_np, False, None)
    np.testing.assert_allclose(np.asarray(out0), out0_ref, rtol=2e-3, atol=2e-3)
    np.testing.assert_allclose(np.asarray(h_new0), h_new0_ref, rtol=2e-3, atol=2e-3)

    # ---- is_last branch ----
    out_last, h_none = transition_forward(prepped, interval, t, co, divided, no, un,
                                          is_last=True, hidden_state=hidden)
    out_last = jax.block_until_ready(out_last)
    out_last_ref, _ = np_reference(params, interval, np.asarray(co),
                                   divided_np, True, np.asarray(hidden))
    np.testing.assert_allclose(np.asarray(out_last), out_last_ref, rtol=2e-3, atol=2e-3)
    assert h_none is None

    print("KERNEL_OK")
</pallas_src>

<mosaic_0001>
module attributes {stable_mosaic.version = 11 : i64} {
  func.func @_not_last_kernel(%arg0: memref<16x32xf32, #tpu.memory_space<vmem>>, %arg1: memref<16x32xf32, #tpu.memory_space<vmem>>, %arg2: memref<16x1xf32, #tpu.memory_space<vmem>>, %arg3: memref<32x96xf32, #tpu.memory_space<vmem>>, %arg4: memref<32x96xf32, #tpu.memory_space<vmem>>, %arg5: memref<2x96xf32, #tpu.memory_space<vmem>>, %arg6: memref<1x32xf32, #tpu.memory_space<vmem>>, %arg7: memref<1x32xf32, #tpu.memory_space<vmem>>, %arg8: memref<16x32xf32, #tpu.memory_space<vmem>>) attributes {dimension_semantics = [], scalar_prefetch = 0 : i64, scratch_operands = 0 : i64, tpu.core_type = #tpu.core_type<tc>} {
    %c0 = arith.constant 0 : index
    %c0_0 = arith.constant 0 : index
    %0 = vector.load %arg5[%c0, %c0_0] : memref<2x96xf32, #tpu.memory_space<vmem>>, vector<2x96xf32>
    %c0_1 = arith.constant 0 : index
    %c0_2 = arith.constant 0 : index
    %1 = vector.load %arg0[%c0_1, %c0_2] : memref<16x32xf32, #tpu.memory_space<vmem>>, vector<16x32xf32>
    %c0_3 = arith.constant 0 : index
    %c0_4 = arith.constant 0 : index
    %2 = vector.load %arg1[%c0_3, %c0_4] : memref<16x32xf32, #tpu.memory_space<vmem>>, vector<16x32xf32>
    %c0_5 = arith.constant 0 : index
    %c0_6 = arith.constant 0 : index
    %3 = vector.load %arg3[%c0_5, %c0_6] : memref<32x96xf32, #tpu.memory_space<vmem>>, vector<32x96xf32>
    %c0_7 = arith.constant 0 : index
    %c0_8 = arith.constant 0 : index
    %4 = vector.load %arg4[%c0_7, %c0_8] : memref<32x96xf32, #tpu.memory_space<vmem>>, vector<32x96xf32>
    %5 = vector.extract_strided_slice %0 {offsets = [0, 0], sizes = [1, 96], strides = [1, 1]} : vector<2x96xf32> to vector<1x96xf32>
    %6 = vector.extract_strided_slice %0 {offsets = [1, 0], sizes = [1, 96], strides = [1, 1]} : vector<2x96xf32> to vector<1x96xf32>
    %cst = arith.constant dense<0.000000e+00> : vector<16x96xf32>
    %7 = tpu.matmul %1, %3, %cst {dimension_numbers = #tpu.dot_dimension_numbers<[1], [0], [0], [1], [0, 0, 1, 1], [], []>} : vector<16x32xf32>, vector<32x96xf32>, vector<16x96xf32> -> vector<16x96xf32>
    %8 = vector.broadcast %5 : vector<1x96xf32> to vector<16x96xf32>
    %9 = arith.addf %7, %8 : vector<16x96xf32>
    %cst_9 = arith.constant dense<0.000000e+00> : vector<16x96xf32>
    %10 = tpu.matmul %2, %4, %cst_9 {dimension_numbers = #tpu.dot_dimension_numbers<[1], [0], [0], [1], [0, 0, 1, 1], [], []>} : vector<16x32xf32>, vector<32x96xf32>, vector<16x96xf32> -> vector<16x96xf32>
    %11 = vector.broadcast %6 : vector<1x96xf32> to vector<16x96xf32>
    %12 = arith.addf %10, %11 : vector<16x96xf32>
    %13 = vector.extract_strided_slice %9 {offsets = [0, 0], sizes = [16, 32], strides = [1, 1]} : vector<16x96xf32> to vector<16x32xf32>
    %14 = vector.extract_strided_slice %12 {offsets = [0, 0], sizes = [16, 32], strides = [1, 1]} : vector<16x96xf32> to vector<16x32xf32>
    %15 = arith.addf %13, %14 : vector<16x32xf32>
    %16 = arith.negf %15 : vector<16x32xf32>
    %17 = math.exp %16 : vector<16x32xf32>
    %cst_10 = arith.constant 1.000000e+00 : f32
    %18 = vector.broadcast %cst_10 : f32 to vector<16x32xf32>
    %19 = arith.addf %18, %17 : vector<16x32xf32>
    %20 = arith.divf %18, %19 : vector<16x32xf32>
    %21 = vector.extract_strided_slice %9 {offsets = [0, 32], sizes = [16, 32], strides = [1, 1]} : vector<16x96xf32> to vector<16x32xf32>
    %22 = vector.extract_strided_slice %12 {offsets = [0, 32], sizes = [16, 32], strides = [1, 1]} : vector<16x96xf32> to vector<16x32xf32>
    %23 = arith.addf %21, %22 : vector<16x32xf32>
    %24 = arith.negf %23 : vector<16x32xf32>
    %25 = math.exp %24 : vector<16x32xf32>
    %cst_11 = arith.constant 1.000000e+00 : f32
    %26 = vector.broadcast %cst_11 : f32 to vector<16x32xf32>
    %27 = arith.addf %26, %25 : vector<16x32xf32>
    %28 = arith.divf %26, %27 : vector<16x32xf32>
    %29 = vector.extract_strided_slice %9 {offsets = [0, 64], sizes = [16, 32], strides = [1, 1]} : vector<16x96xf32> to vector<16x32xf32>
    %30 = vector.extract_strided_slice %12 {offsets = [0, 64], sizes = [16, 32], strides = [1, 1]} : vector<16x96xf32> to vector<16x32xf32>
    %31 = arith.mulf %20, %30 : vector<16x32xf32>
    %32 = arith.addf %29, %31 : vector<16x32xf32>
    %33 = math.tanh %32 : vector<16x32xf32>
    %cst_12 = arith.constant 1.000000e+00 : f32
    %34 = vector.broadcast %cst_12 : f32 to vector<16x32xf32>
    %35 = arith.subf %34, %28 : vector<16x32xf32>
    %36 = arith.mulf %35, %33 : vector<16x32xf32>
    %37 = arith.mulf %28, %2 : vector<16x32xf32>
    %38 = arith.addf %36, %37 : vector<16x32xf32>
    %c0_13 = arith.constant 0 : index
    %c0_14 = arith.constant 0 : index
    %39 = vector.load %arg2[%c0_13, %c0_14] : memref<16x1xf32, #tpu.memory_space<vmem>>, vector<16x1xf32>
    %cst_15 = arith.constant 0.000000e+00 : f32
    %40 = vector.broadcast %cst_15 : f32 to vector<16x1xf32>
    %41 = arith.cmpf ogt, %39, %40 : vector<16x1xf32>
    %cst_16 = arith.constant 0.000000e+00 : f32
    %42 = vector.shape_cast %41 : vector<16x1xi1> to vector<16x1xi1>
    %43 = vector.broadcast %42 : vector<16x1xi1> to vector<16x32xi1>
    %44 = vector.broadcast %cst_16 : f32 to vector<16x32xf32>
    %45 = arith.select %43, %38, %44 : vector<16x32xi1>, vector<16x32xf32>
    %c0_17 = arith.constant 0 : index
    %c0_18 = arith.constant 0 : index
    %46 = vector.load %arg8[%c0_17, %c0_18] : memref<16x32xf32, #tpu.memory_space<vmem>>, vector<16x32xf32>
    tpu.vector_store %arg8[%c0_17, %c0_18], %45 {strides = array<i32>} : memref<16x32xf32, #tpu.memory_space<vmem>>, vector<16x32xf32>,
    %cst_19 = arith.constant 0xFF800000 : f32
    %47 = vector.shape_cast %41 : vector<16x1xi1> to vector<16x1xi1>
    %48 = vector.broadcast %47 : vector<16x1xi1> to vector<16x32xi1>
    %49 = vector.broadcast %cst_19 : f32 to vector<16x32xf32>
    %50 = arith.select %48, %38, %49 : vector<16x32xi1>, vector<16x32xf32>
    %cst_20 = arith.constant dense<0xFF800000> : vector<32xf32>
    %51 = vector.multi_reduction <maximumf>, %50, %cst_20 [0] : vector<16x32xf32> to vector<32xf32>
    %52 = vector.shape_cast %51 : vector<32xf32> to vector<1x32xf32>
    %c0_21 = arith.constant 0 : index
    %c0_22 = arith.constant 0 : index
    %53 = vector.load %arg6[%c0_21, %c0_22] : memref<1x32xf32, #tpu.memory_space<vmem>>, vector<1x32xf32>
    %54 = arith.addf %52, %53 : vector<1x32xf32>
    %c0_23 = arith.constant 0 : index
    %c0_24 = arith.constant 0 : index
    %55 = vector.load %arg7[%c0_23, %c0_24] : memref<1x32xf32, #tpu.memory_space<vmem>>, vector<1x32xf32>
    tpu.vector_store %arg7[%c0_23, %c0_24], %54 {strides = array<i32>} : memref<1x32xf32, #tpu.memory_space<vmem>>, vector<1x32xf32>,
    return
  }
}

</mosaic_0001>

<llo_original>
// kernel: _forward_jit.1
$region0: #{_forward_jit.1}
  #allocation0 [shape = 'u32[]', space=smem, size = 0x4, offset = 0x4, fixed_abs, tag = 'smem constant byte address 0x4 - core index']
  #allocation1 [shape = 'u32[144,128]{1,0:T(1,128)}', space=vmem, size = 0x12000, scoped, tag = 'internal scratch']
  %s0 = inlined_call_operand.vmem [shape: f32[16,32], index: 0, kind: input, shape index: {}]
  %s1 = inlined_call_operand.vmem [shape: f32[16,32], index: 1, kind: input, shape index: {}]
  %s2 = inlined_call_operand.vmem [shape: f32[16,1], index: 2, kind: input, shape index: {}]
  %s3 = inlined_call_operand.vmem [shape: f32[32,96], index: 3, kind: input, shape index: {}]
  %s4 = inlined_call_operand.hbm [shape: f32[32,96], index: 4, kind: input, shape index: {}]
  %s5 = inlined_call_operand.vmem [shape: f32[2,96], index: 5, kind: input, shape index: {}]
  %s6 = inlined_call_operand.vmem [shape: f32[1,32], index: 6, kind: input, shape index: {}]
  %s7 = inlined_call_operand.hbm [shape: f32[1,32], index: 7, kind: output, shape index: {0}]
  %s8 = inlined_call_operand.hbm [shape: f32[16,32], index: 8, kind: output, shape index: {1}]
  %9 = xla_tuple %s7, %s8
  %s10 = sld [smem:[#allocation0]]
  $region50: #{_forward_jit.1} parent=0
    _
  %s12 = ssub.s32 1, %s10
  %s13 = scalar_select 0, %s12, %s10
  $region1: #{_forward_jit.1} parent=0
    #allocation2 [shape = 'u8[16384]{0}', space=vmem, size = 0x4000, scoped, tag = 'input window, operand 4, single buffered']
    #allocation3 [shape = 's32[1]{0}', space=sflag, size = 0x4, scoped, tag = 'scoped memory for _forward_jit.1']
    #allocation4 [shape = 's32[1]{0}', space=sflag, size = 0x4, scoped, tag = 'scoped memory for _forward_jit.1']
    #allocation5 [shape = 'u8[512]{0}', space=vmem, size = 0x400, scoped, tag = 'output window, operand 0, single buffered']
    #allocation6 [shape = 'u8[8192]{0}', space=vmem, size = 0x2000, scoped, tag = 'output window, operand 1, single buffered']
    #allocation7 [shape = 's32[1]{0}', space=sflag, size = 0x4, scoped, tag = 'scoped memory for _forward_jit.1']
    %14 = vsyncpa [#allocation3], 0
    %15 = vsyncpa [#allocation4], 0
    %16 = vsyncpa [#allocation7], 0
    // Predicated region
    $region2: #{_forward_jit.1} parent=1 // pred_check
      _
    $region3: #{_forward_jit.1} parent=1 // pred_check_branch
      %18 = sbr.rel (0) target = $region5
    $region4: #{_forward_jit.1} parent=1 // pred_region
      _
    $region5: #{_forward_jit.1} parent=1 // pred_fallthru
      _
    // Predicated region
    $region6: #{_forward_jit.1} parent=1 // pred_check
      _
    $region7: #{_forward_jit.1} parent=1 // pred_check_branch
      %20 = sbr.rel (0) target = $region9
    $region8: #{_forward_jit.1} parent=1 // pred_region
      _
    $region9: #{_forward_jit.1} parent=1 // pred_fallthru
      _
    // Predicated region
    $region10: #{_forward_jit.1} parent=1 // pred_check
      _
    $region11: #{_forward_jit.1} parent=1 // pred_check_branch
      %22 = sbr.rel (0) target = $region13
    $region12: #{_forward_jit.1} parent=1 // pred_region
      _
    $region13: #{_forward_jit.1} parent=1 // pred_fallthru
      _
    // Predicated region
    $region14: #{_forward_jit.1} parent=1 // pred_check
      _
    $region15: #{_forward_jit.1} parent=1 // pred_check_branch
      %24 = sbr.rel (0) target = $region17
    $region16: #{_forward_jit.1} parent=1 // pred_region
      _
    $region17: #{_forward_jit.1} parent=1 // pred_fallthru
      _
    // Predicated region
    $region18: #{_forward_jit.1} parent=1 // pred_check
      _
    $region19: #{_forward_jit.1} parent=1 // pred_check_branch
      %26 = sbr.rel (0) target = $region21
    $region20: #{_forward_jit.1} parent=1 // pred_region
      %s28 = ssub.s32 512, 512
      %29 = vsyncadd [#allocation3], %s28
      %s30 = sshll.u32 [#allocation2], 4
      %s31 = int_to_ptr.vmem [resolvable:$true] %s30
      %36 = dma.hbm_to_vmem [thread:$0]  %s4, 512, %s31, [#allocation3], 128, 128, 8
    $region21: #{_forward_jit.1} parent=1 // pred_fallthru
      _
    // Predicated region
    $region22: #{_forward_jit.1} parent=1 // pred_check
      _
    $region23: #{_forward_jit.1} parent=1 // pred_check_branch
      %38 = sbr.rel (0) target = $region25
    $region24: #{_forward_jit.1} parent=1 // pred_region
      _
    $region25: #{_forward_jit.1} parent=1 // pred_fallthru
      _
    // Predicated region
    $region26: #{_forward_jit.1} parent=1 // pred_check
      _
    $region27: #{_forward_jit.1} parent=1 // pred_check_branch
      %40 = sbr.rel (0) target = $region29
    $region28: #{_forward_jit.1} parent=1 // pred_region
      _
    $region29: #{_forward_jit.1} parent=1 // pred_fallthru
      _
    // Predicated region
    $region30: #{_forward_jit.1} parent=1 // pred_check
      _
    $region31: #{_forward_jit.1} parent=1 // pred_check_branch
      %42 = sbr.rel (0) target = $region33
    $region32: #{_forward_jit.1} parent=1 // pred_region
      %43 = dma.done [#allocation3], 512
    $region33: #{_forward_jit.1} parent=1 // pred_fallthru
      _
    %v44 = vld [vmem:[%s5] sm:$0x3]
    %v45 = vld [vmem:[%s0] sm:$0xff]
    %v46 = vld [vmem:[%s0 + $0x8] sm:$0xff]
    %v47 = vld [vmem:[%s1] sm:$0xff]
    %v48 = vld [vmem:[%s1 + $0x8] sm:$0xff]
    %v49 = vld [vmem:[%s3] sm:$0xff]
    %v50 = vld [vmem:[%s3 + $0x8] sm:$0xff]
    %v51 = vld [vmem:[%s3 + $0x10] sm:$0xff]
    %v52 = vld [vmem:[%s3 + $0x18] sm:$0xff]
    %v53 = vld [vmem:[#allocation2] sm:$0xff]
    %v54 = vld [vmem:[#allocation2 + $0x8] sm:$0xff]
    %v55 = vld [vmem:[#allocation2 + $0x10] sm:$0xff]
    %v56 = vld [vmem:[#allocation2 + $0x18] sm:$0xff]
    %v57 = vlaneseq
    %v58 = vshrl.u32 %v57, 7
    %v59 = vsub.s32 0, %v58
    %v60 = vrot.slane %v44, %v59
    %vm61 = vcmask 261120
    %v63 = vsel %vm61, %v45, 0
    %v66 = vsel %vm61, %v46, 0
    %68 = vmatprep.subr.mxu0 0.0
    %69 = vmatpush1.msra.mxu0 %v49
    %70 = vmatprep.subr.mxu0 0.0
    %71 = vmatpush1.msra.mxu0 %v50
    %72 = vmatprep.subr.mxu0 0.0
    %73 = vmatpush1.msra.mxu0 %v51
    %74 = vmatprep.subr.mxu0 0.0
    %75 = vmatpush1.msra.mxu0 %v52
    %76 = vmatprep.subr.mxu0 0.0
    %77 = vmatpush1.msra.mxu0 0.0
    %78 = vmatprep.subr.mxu0 0.0
    %79 = vmatpush1.msra.mxu0 0.0
    %80 = vmatprep.subr.mxu0 0.0
    %81 = vmatpush1.msra.mxu0 0.0
    %82 = vmatprep.subr.mxu0 0.0
    %83 = vmatpush1.msra.mxu0 0.0
    %84 = vmatprep.subr.mxu0 0.0
    %85 = vmatpush1.msra.mxu0 0.0
    %86 = vmatprep.subr.mxu0 0.0
    %87 = vmatpush1.msra.mxu0 0.0
    %88 = vmatprep.subr.mxu0 0.0
    %89 = vmatpush1.msra.mxu0 0.0
    %90 = vmatprep.subr.mxu0 0.0
    %91 = vmatpush1.msra.mxu0 0.0
    %92 = vmatprep.subr.mxu0 0.0
    %93 = vmatpush1.msra.mxu0 0.0
    %94 = vmatprep.subr.mxu0 0.0
    %95 = vmatpush1.msra.mxu0 0.0
    %96 = vmatprep.subr.mxu0 0.0
    %97 = vmatpush1.msra.mxu0 0.0
    %98 = vmatprep.subr.mxu0 0.0
    %99 = vmatpush1.msra.mxu0 0.0
    %100 = vmatprep.subr.mxu0 0.0
    %101 = vmatpush1.msra.mxu0 0.0
    %102 = vmatprep.subr.mxu0 0.0
    %103 = vmatpush1.msra.mxu0 0.0
    %104 = vmatprep.subr.mxu0 0.0
    %105 = vmatpush1.msra.mxu0 0.0
    %106 = vmatprep.subr.mxu0 0.0
    %107 = vmatpush1.msra.mxu0 0.0
    %108 = vmatprep.subr.mxu0 0.0
    %109 = vmatpush1.msra.mxu0 0.0
    %110 = vmatprep.subr.mxu0 0.0
    %111 = vmatpush1.msra.mxu0 0.0
    %112 = vmatprep.subr.mxu0 0.0
    %113 = vmatpush1.msra.mxu0 0.0
    %114 = vmatprep.subr.mxu0 0.0
    %115 = vmatpush1.msra.mxu0 0.0
    %116 = vmatprep.subr.mxu0 0.0
    %117 = vmatpush1.msra.mxu0 0.0
    %118 = vmatprep.subr.mxu0 0.0
    %119 = vmatpush1.msra.mxu0 0.0
    %120 = vmatprep.subr.mxu0 0.0
    %121 = vmatpush1.msra.mxu0 0.0
    %122 = vmatprep.subr.mxu0 0.0
    %123 = vmatpush1.msra.mxu0 0.0
    %124 = vmatprep.subr.mxu0 0.0
    %125 = vmatpush1.msra.mxu0 0.0
    %126 = vmatprep.subr.mxu0 0.0
    %127 = vmatpush1.msra.mxu0 0.0
    %128 = vmatprep.subr.mxu0 0.0
    %129 = vmatpush1.msra.mxu0 0.0
    %130 = vmatprep.subr.mxu0 0.0
    %131 = vmatpush1.msra.mxu0 0.0
    %132 = vmatprep.mubr.f32.mxu0 0.0
    %133 = vmatmul.mubr.f32.gmra.mrb[0].mxu0 %v63
    %v134 = vpop.f32.mrb[0].mxu0
    %v135 = vadd.f32 %v60, %v134
    %v136 = vpop.f32.mrb[0].mxu0
    %137 = vmatprep.mubr.f32.mxu0 0.0
    %138 = vmatmul.mubr.f32.gmra.mrb[0].mxu0 %v66
    %v139 = vpop.f32.mrb[0].mxu0
    %v140 = vadd.f32 %v60, %v139
    %v141 = vpop.f32.mrb[0].mxu0
    %142 = vdwg.mxu0
    %v143 = vlaneseq
    %v144 = vshrl.u32 %v143, 7
    %v145 = vsub.s32 1, %v144
    %v146 = vrot.slane %v44, %v145
    %v148 = vsel %vm61, %v47, 0
    %v151 = vsel %vm61, %v48, 0
    %153 = vmatprep.subr.mxu0 0.0
    %154 = vmatpush1.msra.mxu0 %v53
    %155 = vmatprep.subr.mxu0 0.0
    %156 = vmatpush1.msra.mxu0 %v54
    %157 = vmatprep.subr.mxu0 0.0
    %158 = vmatpush1.msra.mxu0 %v55
    %159 = vmatprep.subr.mxu0 0.0
    %160 = vmatpush1.msra.mxu0 %v56
    %161 = vmatprep.subr.mxu0 0.0
    %162 = vmatpush1.msra.mxu0 0.0
    %163 = vmatprep.subr.mxu0 0.0
    %164 = vmatpush1.msra.mxu0 0.0
    %165 = vmatprep.subr.mxu0 0.0
    %166 = vmatpush1.msra.mxu0 0.0
    %167 = vmatprep.subr.mxu0 0.0
    %168 = vmatpush1.msra.mxu0 0.0
    %169 = vmatprep.subr.mxu0 0.0
    %170 = vmatpush1.msra.mxu0 0.0
    %171 = vmatprep.subr.mxu0 0.0
    %172 = vmatpush1.msra.mxu0 0.0
    %173 = vmatprep.subr.mxu0 0.0
    %174 = vmatpush1.msra.mxu0 0.0
    %175 = vmatprep.subr.mxu0 0.0
    %176 = vmatpush1.msra.mxu0 0.0
    %177 = vmatprep.subr.mxu0 0.0
    %178 = vmatpush1.msra.mxu0 0.0
    %179 = vmatprep.subr.mxu0 0.0
    %180 = vmatpush1.msra.mxu0 0.0
    %181 = vmatprep.subr.mxu0 0.0
    %182 = vmatpush1.msra.mxu0 0.0
    %183 = vmatprep.subr.mxu0 0.0
    %184 = vmatpush1.msra.mxu0 0.0
    %185 = vmatprep.subr.mxu0 0.0
    %186 = vmatpush1.msra.mxu0 0.0
    %187 = vmatprep.subr.mxu0 0.0
    %188 = vmatpush1.msra.mxu0 0.0
    %189 = vmatprep.subr.mxu0 0.0
    %190 = vmatpush1.msra.mxu0 0.0
    %191 = vmatprep.subr.mxu0 0.0
    %192 = vmatpush1.msra.mxu0 0.0
    %193 = vmatprep.subr.mxu0 0.0
    %194 = vmatpush1.msra.mxu0 0.0
    %195 = vmatprep.subr.mxu0 0.0
    %196 = vmatpush1.msra.mxu0 0.0
    %197 = vmatprep.subr.mxu0 0.0
    %198 = vmatpush1.msra.mxu0 0.0
    %199 = vmatprep.subr.mxu0 0.0
    %200 = vmatpush1.msra.mxu0 0.0
    %201 = vmatprep.subr.mxu0 0.0
    %202 = vmatpush1.msra.mxu0 0.0
    %203 = vmatprep.subr.mxu0 0.0
    %204 = vmatpush1.msra.mxu0 0.0
    %205 = vmatprep.subr.mxu0 0.0
    %206 = vmatpush1.msra.mxu0 0.0
    %207 = vmatprep.subr.mxu0 0.0
    %208 = vmatpush1.msra.mxu0 0.0
    %209 = vmatprep.subr.mxu0 0.0
    %210 = vmatpush1.msra.mxu0 0.0
    %211 = vmatprep.subr.mxu0 0.0
    %212 = vmatpush1.msra.mxu0 0.0
    %213 = vmatprep.subr.mxu0 0.0
    %214 = vmatpush1.msra.mxu0 0.0
    %215 = vmatprep.subr.mxu0 0.0
    %216 = vmatpush1.msra.mxu0 0.0
    %217 = vmatprep.mubr.f32.mxu0 0.0
    %218 = vmatmul.mubr.f32.gmra.mrb[0].mxu0 %v148
    %v219 = vpop.f32.mrb[0].mxu0
    %v220 = vadd.f32 %v146, %v219
    %v221 = vpop.f32.mrb[0].mxu0
    %222 = vmatprep.mubr.f32.mxu0 0.0
    %223 = vmatmul.mubr.f32.gmra.mrb[0].mxu0 %v151
    %v224 = vpop.f32.mrb[0].mxu0
    %v225 = vadd.f32 %v146, %v224
    %v226 = vpop.f32.mrb[0].mxu0
    %227 = vdwg.mxu0
    %v228 = vadd.f32 %v135, %v220
    %v229 = vadd.f32 %v140, %v225
    %v230 = vxor.u32 %v228, 2147483648
    %v231 = vxor.u32 %v229, 2147483648
    %v232 = vmul.f32 %v230, 1.442695
    %v233 = vpow.pop %v232
    %v234 = vmul.f32 %v231, 1.442695
    %v235 = vpow.pop %v234
    %v236 = vadd.f32 %v233, 1.0
    %v237 = vadd.f32 %v235, 1.0
    %v238 = vrcp.pop %v236
    %v239 = vmul.f32 1.0, %v238
    %v240 = vrcp.pop %v237
    %v241 = vmul.f32 1.0, %v240
    %244 = vrot.lane.b32.xlu0 %v220, 64
    %v245 = vpop.permute.xlu0 %244
    %246 = vrot.lane.b32.xlu0 %v225, 64
    %v247 = vpop.permute.xlu0 %246
    %v250 = vmul.f32 %v239, %v245
    %v251 = vmul.f32 %v241, %v247
    %254 = vrot.lane.b32.xlu0 %v250, 64
    %v255 = vpop.permute.xlu0 %254
    %256 = vrot.lane.b32.xlu0 %v251, 64
    %v257 = vpop.permute.xlu0 %256
    %v260 = vadd.f32 %v135, %v255
    %v261 = vadd.f32 %v140, %v257
    %v262 = vtanh.pop %v260
    %v263 = vtanh.pop %v261
    %v264 = vsub.f32 1.0, %v239
    %v265 = vsub.f32 1.0, %v241
    %268 = vrot.lane.b32.xlu0 %v262, 96
    %v269 = vpop.permute.xlu0 %268
    %270 = vrot.lane.b32.xlu0 %v263, 96
    %v271 = vpop.permute.xlu0 %270
    %v274 = vmul.f32 %v264, %v269
    %v275 = vmul.f32 %v265, %v271
    %276 = vrot.lane.b32.xlu0 %v47, 32
    %v277 = vpop.permute.xlu0 %276
    %278 = vrot.lane.b32.xlu0 %v48, 32
    %v279 = vpop.permute.xlu0 %278
    %v282 = vmul.f32 %v239, %v277
    %v283 = vmul.f32 %v241, %v279
    %v284 = vadd.f32 %v274, %v282
    %v285 = vadd.f32 %v275, %v283
    %v286 = vld [vmem:[%s2] sm:$0xff]
    %v287 = vld [vmem:[%s2 + $0x8] sm:$0xff]
    %vm288 = vcmp.gt.f32.partialorder %v286, 0.0
    %vm289 = vcmp.gt.f32.partialorder %v287, 0.0
    %v290 = vsel %vm288, 1, 0
    %v291 = vsel %vm289, 1, 0
    %292 = vset.pattern.permute.xlu0 0
    %293 = vperm.xlu0 %292, %v290
    %v294 = vpop.permute.xlu0 %293
    %295 = vset.pattern.permute.xlu0 0
    %296 = vperm.xlu0 %295, %v291
    %v297 = vpop.permute.xlu0 %296
    %vm298 = vcmp.eq.s32.totalorder %v294, 1
    %vm299 = vcmp.eq.s32.totalorder %v297, 1
    %v300 = vsel %vm298, %v284, 0.0
    %v301 = vsel %vm299, %v285, 0.0
    %304 = vrot.lane.b32.xlu0 %v300, 96
    %v305 = vpop.permute.xlu0 %304
    %306 = vrot.lane.b32.xlu0 %v301, 96
    %v307 = vpop.permute.xlu0 %306
    %310 = vst.msk [vmem:[#allocation6] sm:$0xff] %vm61, %v305
    %311 = vst.msk [vmem:[#allocation6 + $0x8] sm:$0xff] %vm61, %v307
    %v312 = vsel %vm298, %v284, -inf
    %v313 = vsel %vm299, %v285, -inf
    %vm314 = vcmask 523520
    %v315 = vsel %vm314, %v312, -inf
    %v316 = vsel %vm314, %v313, -inf
    %v317 = vmax.f32 %v315, %v316
    %v318 = vrot.slane %v317, 4
    %v319 = vmax.f32 %v317, %v318
    %v320 = vrot.slane %v319, 2
    %v321 = vmax.f32 %v319, %v320
    %v322 = vrot.slane %v321, 1
    %v323 = vmax.f32 %v321, %v322
    %v324 = vld [vmem:[%s6] sm:$0x1]
    %v326 = vlaneseq
    %v327 = vshrl.u32 %v326, 7
    %v328 = vsub.s32 0, %v327
    %v329 = vrot.slane %v324, %v328
    %330 = vrot.lane.b32.xlu0 %v329, 32
    %v331 = vpop.permute.xlu0 %330
    %v333 = vadd.f32 %v323, %v331
    %335 = vrot.lane.b32.xlu0 %v333, 96
    %v336 = vpop.permute.xlu0 %335
    %vm338 = vcmask 253952
    %339 = vst.msk [vmem:[#allocation5] sm:$0x1] %vm338, %v336
    // Predicated region
    $region34: #{_forward_jit.1} parent=1 // pred_check
      _
    $region35: #{_forward_jit.1} parent=1 // pred_check_branch
      %341 = sbr.rel (0) target = $region37
    $region36: #{_forward_jit.1} parent=1 // pred_region
      %s343 = ssub.s32 16, 16
      %344 = vsyncadd [#allocation4], %s343
      %s346 = sshll.u32 [#allocation5], 4
      %s347 = int_to_ptr.vmem [resolvable:$true] %s346
      %349 = dma.vmem_to_hbm [thread:$0]  %s347, 16, %s7, [#allocation4]
    $region37: #{_forward_jit.1} parent=1 // pred_fallthru
      _
    // Predicated region
    $region38: #{_forward_jit.1} parent=1 // pred_check
      _
    $region39: #{_forward_jit.1} parent=1 // pred_check_branch
      %351 = sbr.rel (0) target = $region41
    $region40: #{_forward_jit.1} parent=1 // pred_region
      %s353 = ssub.s32 256, 256
      %354 = vsyncadd [#allocation7], %s353
      %s355 = sshll.u32 [#allocation6], 4
      %s356 = int_to_ptr.vmem [resolvable:$true] %s355
      %361 = dma.vmem_to_hbm [thread:$0]  %s356, 256, %s8, [#allocation7], 128, 128, 8
    $region41: #{_forward_jit.1} parent=1 // pred_fallthru
      _
    // Predicated region
    $region42: #{_forward_jit.1} parent=1 // pred_check
      _
    $region43: #{_forward_jit.1} parent=1 // pred_check_branch
      %363 = sbr.rel (0) target = $region45
    $region44: #{_forward_jit.1} parent=1 // pred_region
      %364 = dma.done [#allocation4], 16
    $region45: #{_forward_jit.1} parent=1 // pred_fallthru
      _
    // Predicated region
    $region46: #{_forward_jit.1} parent=1 // pred_check
      _
    $region47: #{_forward_jit.1} parent=1 // pred_check_branch
      %366 = sbr.rel (0) target = $region49
    $region48: #{_forward_jit.1} parent=1 // pred_region
      %367 = dma.done [#allocation7], 256
    $region49: #{_forward_jit.1} parent=1 // pred_fallthru
      _
    %368 = vsyncpa [#allocation3], 1
    %369 = vsyncpa [#allocation4], 1
    %370 = vsyncpa [#allocation7], 1

</llo_original>
